<compile_context>
chip_gen: v6e
topology: v6e:2x2x1
jax: 0.10.0
libtpu: 0.0.40
codegen_flags: <defaults>
</compile_context>

<pallas_src>
import functools

import jax
import jax.numpy as jnp
from jax.experimental import pallas as pl
from jax.experimental.pallas import tpu as pltpu

D_X = 8                  # args.d_X
N_MLP_LAYERS = 2         # args.n_mlp_layers -> linears: 1 (in) + (N-1) hidden + 1 (out)
N_MID = N_MLP_LAYERS - 1
NEG_SLOPE = 0.01         # torch LeakyReLU default

_H = 3 * D_X             # fused hidden width   (24)
_O = 3 * D_X * D_X       # fused output width   (192)
_DD = D_X * D_X          # per-matrix width     (64)

_SUB = 256               # in-kernel batch sub-tile (vreg-pressure control)
_MAX_BLOCK = 2048        # batch-block cap (keeps v5e scoped-VMEM comfortable)

# 8-row-aligned parameter-slab layout:
#   rows [0, 24)                    : W_out block-diagonal        [24, 192]
#   row  24                         : b_out (3 matrices concat)   [1, 192]
#   row  25                         : w_in  (3 matrices concat)   [1, 24]  (cols 0:24)
#   row  26                         : b_in  (3 matrices concat)   [1, 24]
#   rows [32 + 32*l, 32 + 32*l+24)  : W_hid block-diag, layer l   [24, 24]
#   row   32 + 32*l + 24            : b_hid, layer l              [1, 24]
_HID_BASE = 32
_HID_STRIDE = 32


def _lrelu(x):
    return jnp.where(x > 0, x, NEG_SLOPE * x)


# ----------------------------------------------------------------------------
# Kernel: one fused MLP (block-diagonal weights) producing the three matrices,
# processed in batch sub-tiles to bound vreg pressure.
# ----------------------------------------------------------------------------
def tv_vae_kernel(t_ref, p_ref, meas_ref, curr_ref, pre_ref, *, n_sub, sub):
    # Static, tile-aligned slices of the packed parameter slab (hoisted out of
    # the sub-tile loop; loaded once per grid step).
    w_out = p_ref[0:_H, :]                           # [24, 192] block-diagonal
    b_out = p_ref[_H:_H + 1, :]                      # [1, 192]
    w_in = p_ref[_H + 1:_H + 2, 0:_H]                # [1, 24]
    b_in = p_ref[_H + 2:_H + 3, 0:_H]                # [1, 24]
    hid = []
    for l in range(N_MID):
        base = _HID_BASE + l * _HID_STRIDE
        hid.append((p_ref[base:base + _H, 0:_H],                 # [24, 24]
                    p_ref[base + _H:base + _H + 1, 0:_H]))       # [1, 24]

    @pl.loop(0, n_sub)
    def _(s):
        off = pl.multiple_of(s * sub, sub)
        t = t_ref[pl.ds(off, sub), :]                            # [sub, 1]

        # Input linear has in_dim == 1: broadcast multiply on the VPU.
        h = _lrelu(t * w_in + b_in)                              # [sub, 24]
        for w_hid, b_hid in hid:
            h = _lrelu(jnp.dot(h, w_hid,
                               preferred_element_type=jnp.float32) + b_hid)

        # One fused MXU push for all three output matrices, then split by lane
        # range into the three output buffers (avoids a wrapper-side copy).
        res = jnp.dot(h, w_out, preferred_element_type=jnp.float32) + b_out  # [sub, 192]
        meas_ref[pl.ds(off, sub), :] = res[:, 0:_DD]
        curr_ref[pl.ds(off, sub), :] = res[:, _DD:2 * _DD]
        pre_ref[pl.ds(off, sub), :] = res[:, 2 * _DD:3 * _DD]


# ----------------------------------------------------------------------------
# Parameter handling (host/XLA side, done once)
# ----------------------------------------------------------------------------
def init_params(key, d_x, n_mlp_layers):
    """Torch-like U(-1/sqrt(fan_in), 1/sqrt(fan_in)) init for the 3 MLPs."""
    n_mid = n_mlp_layers - 1
    ks = jax.random.split(key, 6)

    def u(k, shape, fan_in):
        bound = 1.0 / float(fan_in) ** 0.5
        return jax.random.uniform(k, shape, jnp.float32, -bound, bound)

    return {
        "w_in":  u(ks[0], (3, 1, d_x), 1),
        "b_in":  u(ks[1], (3, 1, d_x), 1),
        "w_hid": u(ks[2], (3, n_mid, d_x, d_x), d_x),
        "b_hid": u(ks[3], (3, n_mid, 1, d_x), d_x),
        "w_out": u(ks[4], (3, d_x, d_x * d_x), d_x),
        "b_out": u(ks[5], (3, 1, d_x * d_x), d_x),
    }


def pack_params(params):
    """Pack the 3 MLPs into one 8-row-aligned [rows, 192] block-diagonal slab."""
    d_x = D_X
    n_mid = params["w_hid"].shape[1]
    rows = _HID_BASE + n_mid * _HID_STRIDE            # already a multiple of 8
    slab = jnp.zeros((rows, _O), jnp.float32)

    w_out_blk = jnp.zeros((_H, _O), jnp.float32)
    for m in range(3):
        w_out_blk = w_out_blk.at[m * d_x:(m + 1) * d_x,
                                 m * d_x * d_x:(m + 1) * d_x * d_x].set(params["w_out"][m])
    slab = slab.at[0:_H, :].set(w_out_blk)
    slab = slab.at[_H, :].set(jnp.concatenate([params["b_out"][m][0] for m in range(3)], -1))
    slab = slab.at[_H + 1, 0:_H].set(jnp.concatenate([params["w_in"][m][0] for m in range(3)], -1))
    slab = slab.at[_H + 2, 0:_H].set(jnp.concatenate([params["b_in"][m][0] for m in range(3)], -1))

    for l in range(n_mid):
        base = _HID_BASE + l * _HID_STRIDE
        w_hid_blk = jnp.zeros((_H, _H), jnp.float32)
        for m in range(3):
            w_hid_blk = w_hid_blk.at[m * d_x:(m + 1) * d_x,
                                     m * d_x:(m + 1) * d_x].set(params["w_hid"][m, l])
        slab = slab.at[base:base + _H, 0:_H].set(w_hid_blk)
        slab = slab.at[base + _H, 0:_H].set(
            jnp.concatenate([params["b_hid"][m, l][0] for m in range(3)], -1))
    return slab


# ----------------------------------------------------------------------------
# Batch-block selection
# ----------------------------------------------------------------------------
def _choose_block_b(B):
    if B < 16:
        return max(B, 1)
    # >= 2 grid steps so v7x's two TensorCores both get work, but as few steps
    # as possible (per-step fixed cost ~0.35 µs dominates at these shapes).
    blk = min(B // 2, _MAX_BLOCK)
    if blk > _SUB:
        blk = (blk // _SUB) * _SUB      # multiple of the in-kernel sub-tile
    else:
        blk = max(8, (blk // 8) * 8)    # clean sublane tiling
    return blk


# ----------------------------------------------------------------------------
# Forward wrapper
# ----------------------------------------------------------------------------
def tv_vae_forward(X, T, packed_params):
    # TODO(synk): RNNEncoder / TimeLagTransitionDecoder bodies are not given in
    # the spec; the transformed X = bmm(I - meas_adj_mat, X[..., None]) only
    # feeds them, and forward() returns nothing derived from X, so X is unused.
    del X
    B = T.shape[0]
    T = T.reshape(B, 1).astype(jnp.float32)

    block_b = _choose_block_b(B)
    n_blocks = -(-B // block_b)
    B_pad = n_blocks * block_b
    if B_pad != B:
        T = jnp.pad(T, ((0, B_pad - B), (0, 0)))

    sub = block_b if block_b <= _SUB else _SUB
    n_sub = block_b // sub
    kernel = functools.partial(tv_vae_kernel, n_sub=n_sub, sub=sub)

    flops = int(B_pad) * 2 * (_H * _H * N_MID + _H * _O)
    bytes_accessed = int(B_pad * 4 + packed_params.size * 4 + B_pad * 3 * _DD * 4)
    cost = pl.CostEstimate(flops=flops, transcendentals=0,
                           bytes_accessed=bytes_accessed)

    out_shape = tuple(jax.ShapeDtypeStruct((B_pad, _DD), jnp.float32) for _ in range(3))

    meas, curr, pre = pl.pallas_call(
        kernel,
        out_shape=out_shape,
        grid=(n_blocks,),
        in_specs=[
            pl.BlockSpec((block_b, 1), lambda i: (i, 0)),            # T
            # Constant block index -> the pipeline revisits the same block, so
            # the ~48 KB parameter slab is DMA'd once per call, not per step.
            pl.BlockSpec(packed_params.shape, lambda i: (0, 0)),
        ],
        out_specs=[
            pl.BlockSpec((block_b, _DD), lambda i: (i, 0)),
            pl.BlockSpec((block_b, _DD), lambda i: (i, 0)),
            pl.BlockSpec((block_b, _DD), lambda i: (i, 0)),
        ],
        compiler_params=pltpu.CompilerParams(dimension_semantics=("parallel",)),
        cost_estimate=cost,
    )(T, packed_params)

    # [B,64] -> [B,8,8] is a layout-free reshape; the un-padding slice is a no-op
    # when B_pad == B.
    meas_adj_mat = meas[:B].reshape(B, D_X, D_X)
    curr2m_mat = curr[:B].reshape(B, D_X, D_X)
    pre2m_mat = pre[:B].reshape(B, D_X, D_X)
    return meas_adj_mat, curr2m_mat, pre2m_mat


# ----------------------------------------------------------------------------
# Pure-JAX reference (unfused) for correctness checks
# ----------------------------------------------------------------------------
def ref_forward(T, params):
    outs = []
    for m in range(3):
        h = _lrelu(T * params["w_in"][m] + params["b_in"][m])
        for l in range(N_MID):
            h = _lrelu(h @ params["w_hid"][m, l] + params["b_hid"][m, l])
        o = h @ params["w_out"][m] + params["b_out"][m]
        outs.append(o.reshape(T.shape[0], D_X, D_X))
    return tuple(outs)


def _check(B, key, params, packed, fwd):
    k_x, k_t = jax.random.split(key, 2)
    X = jax.random.normal(k_x, (B, D_X), jnp.float32)
    T = jax.random.uniform(k_t, (B, 1), jnp.float32)
    got = fwd(X, T, packed)
    jax.block_until_ready(got)
    want = ref_forward(T, params)
    for g, w in zip(got, want):
        assert g.shape == (B, D_X, D_X)
        assert bool(jnp.allclose(g, w, atol=1e-3, rtol=1e-3)), \
            float(jnp.max(jnp.abs(g - w)))


if __name__ == "__main__":
    key = jax.random.PRNGKey(0)
    k_a, k_b, k_p = jax.random.split(key, 3)

    params = init_params(k_p, D_X, N_MLP_LAYERS)
    packed = pack_params(params)                  # one-time packing

    fwd = jax.jit(tv_vae_forward)

    # Main small-shape test (B=8) + a larger one exercising batch padding,
    # multiple parallel grid steps, and the in-kernel sub-tile loop.
    _check(8, k_a, params, packed, fwd)
    _check(1040, k_b, params, packed, fwd)

    print("KERNEL_OK")
</pallas_src>

<mosaic_0001>
module attributes {stable_mosaic.version = 11 : i64} {
  func.func @tv_vae_kernel(%arg0: i32, %arg1: memref<8x1xf32, #tpu.memory_space<vmem>>, %arg2: memref<64x192xf32, #tpu.memory_space<vmem>>, %arg3: memref<8x64xf32, #tpu.memory_space<vmem>>, %arg4: memref<8x64xf32, #tpu.memory_space<vmem>>, %arg5: memref<8x64xf32, #tpu.memory_space<vmem>>) attributes {dimension_semantics = [#tpu.dimension_semantics<parallel>], iteration_bounds = array<i64: 1>, scalar_prefetch = 0 : i64, scratch_operands = 0 : i64, tpu.core_type = #tpu.core_type<tc>, window_params = [{transform_indices = @transform_0, window_bounds = array<i64: 8, 1>}, {pipeline_mode = #tpu.pipeline_mode<synchronous>, transform_indices = @transform_1, window_bounds = array<i64: 64, 192>}, {transform_indices = @transform_2, window_bounds = array<i64: 8, 64>}, {transform_indices = @transform_3, window_bounds = array<i64: 8, 64>}, {transform_indices = @transform_4, window_bounds = array<i64: 8, 64>}]} {
    %c0 = arith.constant 0 : index
    %c0_0 = arith.constant 0 : index
    %0 = vector.load %arg2[%c0, %c0_0] : memref<64x192xf32, #tpu.memory_space<vmem>>, vector<24x192xf32>
    %c24 = arith.constant 24 : index
    %c0_1 = arith.constant 0 : index
    %1 = vector.load %arg2[%c24, %c0_1] : memref<64x192xf32, #tpu.memory_space<vmem>>, vector<1x192xf32>
    %c25 = arith.constant 25 : index
    %c0_2 = arith.constant 0 : index
    %2 = vector.load %arg2[%c25, %c0_2] : memref<64x192xf32, #tpu.memory_space<vmem>>, vector<1x24xf32>
    %c26 = arith.constant 26 : index
    %c0_3 = arith.constant 0 : index
    %3 = vector.load %arg2[%c26, %c0_3] : memref<64x192xf32, #tpu.memory_space<vmem>>, vector<1x24xf32>
    %c32 = arith.constant 32 : index
    %c0_4 = arith.constant 0 : index
    %4 = vector.load %arg2[%c32, %c0_4] : memref<64x192xf32, #tpu.memory_space<vmem>>, vector<24x24xf32>
    %c56 = arith.constant 56 : index
    %c0_5 = arith.constant 0 : index
    %5 = vector.load %arg2[%c56, %c0_5] : memref<64x192xf32, #tpu.memory_space<vmem>>, vector<1x24xf32>
    %c0_i32 = arith.constant 0 : i32
    %c1_i32 = arith.constant 1 : i32
    %6 = arith.muli %c0_i32, %c1_i32 : i32
    %c0_i32_6 = arith.constant 0 : i32
    %7 = arith.addi %c0_i32_6, %6 : i32
    %c8_i32 = arith.constant 8 : i32
    %8 = arith.muli %7, %c8_i32 : i32
    %9 = tpu.assume_multiple %8, 8 : i32
    %10 = arith.index_cast %9 : i32 to index
    %c0_7 = arith.constant 0 : index
    %11 = vector.load %arg1[%10, %c0_7] : memref<8x1xf32, #tpu.memory_space<vmem>>, vector<8x1xf32>
    %12 = vector.broadcast %11 : vector<8x1xf32> to vector<8x24xf32>
    %13 = vector.broadcast %2 : vector<1x24xf32> to vector<8x24xf32>
    %14 = arith.mulf %12, %13 : vector<8x24xf32>
    %15 = vector.broadcast %3 : vector<1x24xf32> to vector<8x24xf32>
    %16 = arith.addf %14, %15 : vector<8x24xf32>
    %cst = arith.constant 0.000000e+00 : f32
    %17 = vector.broadcast %cst : f32 to vector<8x24xf32>
    %18 = arith.cmpf ogt, %16, %17 : vector<8x24xf32>
    %cst_8 = arith.constant 0.00999999977 : f32
    %19 = vector.broadcast %cst_8 : f32 to vector<8x24xf32>
    %20 = arith.mulf %19, %16 : vector<8x24xf32>
    %21 = arith.select %18, %16, %20 : vector<8x24xi1>, vector<8x24xf32>
    %cst_9 = arith.constant dense<0.000000e+00> : vector<8x24xf32>
    %22 = tpu.matmul %21, %4, %cst_9 {dimension_numbers = #tpu.dot_dimension_numbers<[1], [0], [0], [1], [0, 0, 1, 1], [], []>} : vector<8x24xf32>, vector<24x24xf32>, vector<8x24xf32> -> vector<8x24xf32>
    %23 = vector.broadcast %5 : vector<1x24xf32> to vector<8x24xf32>
    %24 = arith.addf %22, %23 : vector<8x24xf32>
    %cst_10 = arith.constant 0.000000e+00 : f32
    %25 = vector.broadcast %cst_10 : f32 to vector<8x24xf32>
    %26 = arith.cmpf ogt, %24, %25 : vector<8x24xf32>
    %cst_11 = arith.constant 0.00999999977 : f32
    %27 = vector.broadcast %cst_11 : f32 to vector<8x24xf32>
    %28 = arith.mulf %27, %24 : vector<8x24xf32>
    %29 = arith.select %26, %24, %28 : vector<8x24xi1>, vector<8x24xf32>
    %cst_12 = arith.constant dense<0.000000e+00> : vector<8x192xf32>
    %30 = tpu.matmul %29, %0, %cst_12 {dimension_numbers = #tpu.dot_dimension_numbers<[1], [0], [0], [1], [0, 0, 1, 1], [], []>} : vector<8x24xf32>, vector<24x192xf32>, vector<8x192xf32> -> vector<8x192xf32>
    %31 = vector.broadcast %1 : vector<1x192xf32> to vector<8x192xf32>
    %32 = arith.addf %30, %31 : vector<8x192xf32>
    %33 = vector.extract_strided_slice %32 {offsets = [0, 0], sizes = [8, 64], strides = [1, 1]} : vector<8x192xf32> to vector<8x64xf32>
    %34 = arith.index_cast %9 : i32 to index
    %c0_13 = arith.constant 0 : index
    %35 = vector.load %arg3[%34, %c0_13] : memref<8x64xf32, #tpu.memory_space<vmem>>, vector<8x64xf32>
    tpu.vector_store %arg3[%34, %c0_13], %33 {strides = array<i32>} : memref<8x64xf32, #tpu.memory_space<vmem>>, vector<8x64xf32>,
    %36 = vector.extract_strided_slice %32 {offsets = [0, 64], sizes = [8, 64], strides = [1, 1]} : vector<8x192xf32> to vector<8x64xf32>
    %37 = arith.index_cast %9 : i32 to index
    %c0_14 = arith.constant 0 : index
    %38 = vector.load %arg4[%37, %c0_14] : memref<8x64xf32, #tpu.memory_space<vmem>>, vector<8x64xf32>
    tpu.vector_store %arg4[%37, %c0_14], %36 {strides = array<i32>} : memref<8x64xf32, #tpu.memory_space<vmem>>, vector<8x64xf32>,
    %39 = vector.extract_strided_slice %32 {offsets = [0, 128], sizes = [8, 64], strides = [1, 1]} : vector<8x192xf32> to vector<8x64xf32>
    %40 = arith.index_cast %9 : i32 to index
    %c0_15 = arith.constant 0 : index
    %41 = vector.load %arg5[%40, %c0_15] : memref<8x64xf32, #tpu.memory_space<vmem>>, vector<8x64xf32>
    tpu.vector_store %arg5[%40, %c0_15], %39 {strides = array<i32>} : memref<8x64xf32, #tpu.memory_space<vmem>>, vector<8x64xf32>,
    %c1_i32_16 = arith.constant 1 : i32
    return
  }
  func.func @transform_0(%arg0: i32) -> (i32, i32) {
    %c0_i32 = arith.constant 0 : i32
    %c0_i32_0 = arith.constant 0 : i32
    return %arg0, %c0_i32 : i32, i32
  }
  func.func @transform_1(%arg0: i32) -> (i32, i32) {
    %c0_i32 = arith.constant 0 : i32
    %c0_i32_0 = arith.constant 0 : i32
    %c0_i32_1 = arith.constant 0 : i32
    return %c0_i32, %c0_i32_0 : i32, i32
  }
  func.func @transform_2(%arg0: i32) -> (i32, i32) {
    %c0_i32 = arith.constant 0 : i32
    %c0_i32_0 = arith.constant 0 : i32
    return %arg0, %c0_i32 : i32, i32
  }
  func.func @transform_3(%arg0: i32) -> (i32, i32) {
    %c0_i32 = arith.constant 0 : i32
    %c0_i32_0 = arith.constant 0 : i32
    return %arg0, %c0_i32 : i32, i32
  }
  func.func @transform_4(%arg0: i32) -> (i32, i32) {
    %c0_i32 = arith.constant 0 : i32
    %c0_i32_0 = arith.constant 0 : i32
    return %arg0, %c0_i32 : i32, i32
  }
}

</mosaic_0001>

<llo_original>
// kernel: tv_vae_forward.1
$region0: #{tv_vae_forward.1}
  #allocation0 [shape = 'u32[]', space=smem, size = 0x4, offset = 0x4, fixed_abs, tag = 'smem constant byte address 0x4 - core index']
  #allocation1 [shape = 'u32[144,128]{1,0:T(1,128)}', space=vmem, size = 0x12000, scoped, tag = 'internal scratch']
  %s0 = inlined_call_operand.vmem [shape: f32[8,1], index: 0, kind: input, shape index: {}]
  %s1 = inlined_call_operand.hbm [shape: f32[64,192], index: 1, kind: input, shape index: {}]
  %s2 = inlined_call_operand.vmem [shape: f32[8,64], index: 2, kind: output, shape index: {0}]
  %s3 = inlined_call_operand.vmem [shape: f32[8,64], index: 3, kind: output, shape index: {1}]
  %s4 = inlined_call_operand.vmem [shape: f32[8,64], index: 4, kind: output, shape index: {2}]
  %5 = xla_tuple %s2, %s3, %s4
  %s6 = sld [smem:[#allocation0]]
  $region38: #{tv_vae_forward.1} parent=0
    _
  %s8 = ssub.s32 1, %s6
  %s9 = scalar_select 0, %s8, %s6
  $region1: #{tv_vae_forward.1} parent=0
    #allocation2 [shape = 'u8[65536]{0}', space=vmem, size = 0x10000, scoped, tag = 'input window, operand 1, single buffered']
    #allocation3 [shape = 's32[1]{0}', space=sflag, size = 0x4, scoped, tag = 'scoped memory for tv_vae_forward.1']
    %10 = vsyncpa [#allocation3], 0
    // Predicated region
    $region2: #{tv_vae_forward.1} parent=1 // pred_check
      _
    $region3: #{tv_vae_forward.1} parent=1 // pred_check_branch
      %12 = sbr.rel (0) target = $region5
    $region4: #{tv_vae_forward.1} parent=1 // pred_region
      _
    $region5: #{tv_vae_forward.1} parent=1 // pred_fallthru
      _
    // Predicated region
    $region6: #{tv_vae_forward.1} parent=1 // pred_check
      _
    $region7: #{tv_vae_forward.1} parent=1 // pred_check_branch
      %14 = sbr.rel (0) target = $region9
    $region8: #{tv_vae_forward.1} parent=1 // pred_region
      %s16 = ssub.s32 2048, 2048
      %17 = vsyncadd [#allocation3], %s16
      %s18 = sshll.u32 [#allocation2], 4
      %s19 = int_to_ptr.vmem [resolvable:$true] %s18
      %24 = dma.hbm_to_vmem [thread:$0]  %s1, 2048, %s19, [#allocation3], 256, 256, 16
    $region9: #{tv_vae_forward.1} parent=1 // pred_fallthru
      _
    // Predicated region
    $region10: #{tv_vae_forward.1} parent=1 // pred_check
      _
    $region11: #{tv_vae_forward.1} parent=1 // pred_check_branch
      %26 = sbr.rel (0) target = $region13
    $region12: #{tv_vae_forward.1} parent=1 // pred_region
      %27 = dma.done [#allocation3], 2048
    $region13: #{tv_vae_forward.1} parent=1 // pred_fallthru
      _
    %v28 = vld [vmem:[#allocation2] sm:$0xff]
    %v29 = vld [vmem:[#allocation2 + $0x8] sm:$0xff]
    %v30 = vld [vmem:[#allocation2 + $0x10] sm:$0xff]
    %v31 = vld [vmem:[#allocation2 + $0x18] sm:$0xff]
    %v32 = vld [vmem:[#allocation2 + $0x20] sm:$0xff]
    %v33 = vld [vmem:[#allocation2 + $0x28] sm:$0xff]
    %s34 = scalar_lea.vmem [#allocation2], 48
    %v35 = vld [vmem:[%s34] ss:$8 sm:$0x3]
    %v36 = vld [vmem:[#allocation2 + $0x31] ss:$0 sm:$0xff]
    %v37 = vld [vmem:[#allocation2 + $0x32] ss:$0 sm:$0xff]
    %v38 = vld [vmem:[#allocation2 + $0x40] sm:$0xff]
    %v39 = vld [vmem:[#allocation2 + $0x50] sm:$0xff]
    %v40 = vld [vmem:[#allocation2 + $0x60] sm:$0xff]
    %v41 = vld [vmem:[#allocation2 + $0x70] ss:$0 sm:$0xff]
    %v42 = vld [vmem:[%s0] sm:$0xff]
    %44 = vset.pattern.permute.xlu0 0
    %45 = vperm.xlu0 %44, %v42
    %v46 = vpop.permute.xlu0 %45
    %v48 = vmul.f32 %v46, %v36
    %v49 = vadd.f32 %v48, %v37
    %vm50 = vcmp.gt.f32.partialorder %v49, 0.0
    %v51 = vmul.f32 %v49, 0.01
    %v52 = vsel %vm50, %v49, %v51
    %vm53 = vcmask 195584
    %v55 = vsel %vm53, %v52, 0
    %57 = vmatprep.subr.mxu0 0.0
    %58 = vmatpush1.msra.mxu0 0.0
    %59 = vmatprep.subr.mxu0 0.0
    %60 = vmatpush1.msra.mxu0 0.0
    %61 = vmatprep.subr.mxu0 0.0
    %62 = vmatpush1.msra.mxu0 0.0
    %63 = vmatprep.subr.mxu0 0.0
    %64 = vmatpush1.msra.mxu0 0.0
    %65 = vmatprep.subr.mxu0 0.0
    %66 = vmatpush1.msra.mxu0 0.0
    %67 = vmatprep.subr.mxu0 0.0
    %68 = vmatpush1.msra.mxu0 0.0
    %69 = vmatprep.subr.mxu0 0.0
    %70 = vmatpush1.msra.mxu0 0.0
    %71 = vmatprep.subr.mxu0 0.0
    %72 = vmatpush1.msra.mxu0 0.0
    %73 = vmatprep.subr.mxu0 0.0
    %74 = vmatpush1.msra.mxu0 0.0
    %75 = vmatprep.subr.mxu0 0.0
    %76 = vmatpush1.msra.mxu0 0.0
    %77 = vmatprep.subr.mxu0 0.0
    %78 = vmatpush1.msra.mxu0 0.0
    %79 = vmatprep.subr.mxu0 0.0
    %80 = vmatpush1.msra.mxu0 0.0
    %81 = vmatprep.subr.mxu0 0.0
    %82 = vmatpush1.msra.mxu0 0.0
    %83 = vmatprep.subr.mxu0 0.0
    %84 = vmatpush1.msra.mxu0 %v40
    %85 = vmatprep.subr.mxu0 0.0
    %86 = vmatpush1.msra.mxu0 %v39
    %87 = vmatprep.subr.mxu0 0.0
    %88 = vmatpush1.msra.mxu0 %v38
    %89 = vmatprep.subr.mxu0 0.0
    %90 = vmatpush2.msra.mxu0 0.0
    %91 = vmatprep.subr.mxu0 0.0
    %92 = vmatpush2.msra.mxu0 0.0
    %93 = vmatprep.subr.mxu0 0.0
    %94 = vmatpush2.msra.mxu0 0.0
    %95 = vmatprep.subr.mxu0 0.0
    %96 = vmatpush2.msra.mxu0 0.0
    %97 = vmatprep.subr.mxu0 0.0
    %98 = vmatpush2.msra.mxu0 0.0
    %99 = vmatprep.subr.mxu0 0.0
    %100 = vmatpush2.msra.mxu0 0.0
    %101 = vmatprep.subr.mxu0 0.0
    %102 = vmatpush2.msra.mxu0 0.0
    %103 = vmatprep.subr.mxu0 0.0
    %104 = vmatpush2.msra.mxu0 0.0
    %105 = vmatprep.subr.mxu0 0.0
    %106 = vmatpush2.msra.mxu0 0.0
    %107 = vmatprep.subr.mxu0 0.0
    %108 = vmatpush2.msra.mxu0 0.0
    %109 = vmatprep.subr.mxu0 0.0
    %110 = vmatpush2.msra.mxu0 0.0
    %111 = vmatprep.subr.mxu0 0.0
    %112 = vmatpush2.msra.mxu0 0.0
    %113 = vmatprep.subr.mxu0 0.0
    %114 = vmatpush2.msra.mxu0 0.0
    %115 = vmatprep.subr.mxu0 0.0
    %116 = vmatpush2.msra.mxu0 0.0
    %117 = vmatprep.subr.mxu0 0.0
    %118 = vmatpush2.msra.mxu0 0.0
    %119 = vmatprep.subr.mxu0 0.0
    %120 = vmatpush2.msra.mxu0 0.0
    %121 = vmatprep.mubr.f32.mxu0 0.0
    %122 = vmatmul.mubr.f32.gmra.mxu0 %v55
    %v123 = vpop.f32.mrf.mxu0
    %v124 = vadd.f32 %v41, %v123
    %v125 = vpop.f32.mrf.mxu0
    %126 = vdwg.mxu0
    %vm127 = vcmp.gt.f32.partialorder %v124, 0.0
    %v128 = vmul.f32 %v124, 0.01
    %v129 = vsel %vm127, %v124, %v128
    %v131 = vlaneseq
    %v132 = vshrl.u32 %v131, 7
    %v133 = vsub.s32 0, %v132
    %v134 = vrot.slane %v35, %v133
    %v135 = vlaneseq
    %v136 = vshrl.u32 %v135, 7
    %v137 = vsub.s32 1, %v136
    %v138 = vrot.slane %v35, %v137
    %v142 = vsel %vm53, %v129, 0
    %144 = vmatprep.subr.mxu0 0.0
    %145 = vmatpush1.msra.mxu0 0.0
    %146 = vmatprep.subr.mxu0 0.0
    %147 = vmatpush1.msra.mxu0 0.0
    %148 = vmatprep.subr.mxu0 0.0
    %149 = vmatpush1.msra.mxu0 0.0
    %150 = vmatprep.subr.mxu0 0.0
    %151 = vmatpush1.msra.mxu0 0.0
    %152 = vmatprep.subr.mxu0 0.0
    %153 = vmatpush1.msra.mxu0 0.0
    %154 = vmatprep.subr.mxu0 0.0
    %155 = vmatpush1.msra.mxu0 0.0
    %156 = vmatprep.subr.mxu0 0.0
    %157 = vmatpush1.msra.mxu0 0.0
    %158 = vmatprep.subr.mxu0 0.0
    %159 = vmatpush1.msra.mxu0 0.0
    %160 = vmatprep.subr.mxu0 0.0
    %161 = vmatpush1.msra.mxu0 0.0
    %162 = vmatprep.subr.mxu0 0.0
    %163 = vmatpush1.msra.mxu0 0.0
    %164 = vmatprep.subr.mxu0 0.0
    %165 = vmatpush1.msra.mxu0 0.0
    %166 = vmatprep.subr.mxu0 0.0
    %167 = vmatpush1.msra.mxu0 0.0
    %168 = vmatprep.subr.mxu0 0.0
    %169 = vmatpush1.msra.mxu0 0.0
    %170 = vmatprep.subr.mxu0 %v33
    %171 = vmatpush1.msra.mxu0 %v32
    %172 = vmatprep.subr.mxu0 %v31
    %173 = vmatpush1.msra.mxu0 %v30
    %174 = vmatprep.subr.mxu0 %v29
    %175 = vmatpush1.msra.mxu0 %v28
    %176 = vmatprep.subr.mxu0 0.0
    %177 = vmatpush2.msra.mxu0 0.0
    %178 = vmatprep.subr.mxu0 0.0
    %179 = vmatpush2.msra.mxu0 0.0
    %180 = vmatprep.subr.mxu0 0.0
    %181 = vmatpush2.msra.mxu0 0.0
    %182 = vmatprep.subr.mxu0 0.0
    %183 = vmatpush2.msra.mxu0 0.0
    %184 = vmatprep.subr.mxu0 0.0
    %185 = vmatpush2.msra.mxu0 0.0
    %186 = vmatprep.subr.mxu0 0.0
    %187 = vmatpush2.msra.mxu0 0.0
    %188 = vmatprep.subr.mxu0 0.0
    %189 = vmatpush2.msra.mxu0 0.0
    %190 = vmatprep.subr.mxu0 0.0
    %191 = vmatpush2.msra.mxu0 0.0
    %192 = vmatprep.subr.mxu0 0.0
    %193 = vmatpush2.msra.mxu0 0.0
    %194 = vmatprep.subr.mxu0 0.0
    %195 = vmatpush2.msra.mxu0 0.0
    %196 = vmatprep.subr.mxu0 0.0
    %197 = vmatpush2.msra.mxu0 0.0
    %198 = vmatprep.subr.mxu0 0.0
    %199 = vmatpush2.msra.mxu0 0.0
    %200 = vmatprep.subr.mxu0 0.0
    %201 = vmatpush2.msra.mxu0 0.0
    %202 = vmatprep.subr.mxu0 0.0
    %203 = vmatpush2.msra.mxu0 0.0
    %204 = vmatprep.subr.mxu0 0.0
    %205 = vmatpush2.msra.mxu0 0.0
    %206 = vmatprep.subr.mxu0 0.0
    %207 = vmatpush2.msra.mxu0 0.0
    %208 = vmatprep.mubr.f32.mxu0 0.0
    %209 = vmatmul.mubr.f32.gmra.mxu0 %v142
    %v210 = vpop.f32.mrf.mxu0
    %v211 = vadd.f32 %v134, %v210
    %v212 = vpop.f32.mrf.mxu0
    %v213 = vadd.f32 %v138, %v212
    %214 = vdwg.mxu0
    %vm215 = vcmask 523264
    %216 = vst.msk [vmem:[%s2] sm:$0xff] %vm215, %v211
    %218 = vrot.lane.b32.xlu0 %v211, 64
    %v219 = vpop.permute.xlu0 %218
    %221 = vst.msk [vmem:[%s3] sm:$0xff] %vm215, %v219
    %222 = vst.msk [vmem:[%s4] sm:$0xff] %vm215, %v213
    // Predicated region
    $region14: #{tv_vae_forward.1} parent=1 // pred_check
      _
    $region15: #{tv_vae_forward.1} parent=1 // pred_check_branch
      %224 = sbr.rel (0) target = $region17
    $region16: #{tv_vae_forward.1} parent=1 // pred_region
      _
    $region17: #{tv_vae_forward.1} parent=1 // pred_fallthru
      _
    // Predicated region
    $region18: #{tv_vae_forward.1} parent=1 // pred_check
      _
    $region19: #{tv_vae_forward.1} parent=1 // pred_check_branch
      %226 = sbr.rel (0) target = $region21
    $region20: #{tv_vae_forward.1} parent=1 // pred_region
      _
    $region21: #{tv_vae_forward.1} parent=1 // pred_fallthru
      _
    // Predicated region
    $region22: #{tv_vae_forward.1} parent=1 // pred_check
      _
    $region23: #{tv_vae_forward.1} parent=1 // pred_check_branch
      %228 = sbr.rel (0) target = $region25
    $region24: #{tv_vae_forward.1} parent=1 // pred_region
      _
    $region25: #{tv_vae_forward.1} parent=1 // pred_fallthru
      _
    // Predicated region
    $region26: #{tv_vae_forward.1} parent=1 // pred_check
      _
    $region27: #{tv_vae_forward.1} parent=1 // pred_check_branch
      %230 = sbr.rel (0) target = $region29
    $region28: #{tv_vae_forward.1} parent=1 // pred_region
      _
    $region29: #{tv_vae_forward.1} parent=1 // pred_fallthru
      _
    // Predicated region
    $region30: #{tv_vae_forward.1} parent=1 // pred_check
      _
    $region31: #{tv_vae_forward.1} parent=1 // pred_check_branch
      %232 = sbr.rel (0) target = $region33
    $region32: #{tv_vae_forward.1} parent=1 // pred_region
      _
    $region33: #{tv_vae_forward.1} parent=1 // pred_fallthru
      _
    // Predicated region
    $region34: #{tv_vae_forward.1} parent=1 // pred_check
      _
    $region35: #{tv_vae_forward.1} parent=1 // pred_check_branch
      %234 = sbr.rel (0) target = $region37
    $region36: #{tv_vae_forward.1} parent=1 // pred_region
      _
    $region37: #{tv_vae_forward.1} parent=1 // pred_fallthru
      _
    %235 = vsyncpa [#allocation3], 1

</llo_original>
